<compile_context>
chip_gen: v5e
topology: v5e:2x2
jax: 0.10.0
libtpu: 0.0.40
codegen_flags: <defaults>
</compile_context>

<pallas_src>
import functools

import jax
import jax.numpy as jnp
from jax import lax
from jax.experimental import pallas as pl
from jax.experimental.pallas import tpu as pltpu


def _phi(af):
    if af == "relu":
        return lambda x: jnp.maximum(x, 0.0)
    if af == "tanh":
        return jnp.tanh
    if af == "linear":
        return lambda x: x
    raise ValueError("No valid activation function.")


def _general_rnn_kernel(x_ref, wt_ref, b_ref, lam_ref, o_ref, *, af, seq_len,
                        visible_size):
    # x_ref  : (Bb, T, V)   one batch block, visible features only
    # wt_ref : (F, F)       W.T (input-major), so W(R) = R @ wt + b
    # b_ref  : (1, F)       bias (zeros if bias=False)
    # lam_ref: (V, F)       Lambda
    # o_ref  : (Bb, 1, V)   diag(U[:, :, :V]) after the final time step
    Bb = x_ref.shape[0]
    T = seq_len
    V = visible_size
    F = wt_ref.shape[0]
    phi = _phi(af)

    Wt = wt_ref[...]                                        # (F, F)
    lam = lam_ref[...]                                      # (V, F)

    # ---- hoisted loop invariants (JAX does not CSE broadcast_in_dim) ----
    lam_b = jnp.broadcast_to(lam[None, :, :], (Bb, V, F))
    om_lam_b = jnp.broadcast_to((1.0 - lam)[None, :, :], (Bb, V, F))
    bias_b = jnp.broadcast_to(b_ref[...].reshape(1, 1, F), (Bb, V, F))

    # (V, F) selector: eye[i, j] = 1 iff i == j (only columns j < V hit).
    row = lax.broadcasted_iota(jnp.int32, (V, F), 0)
    col = lax.broadcasted_iota(jnp.int32, (V, F), 1)
    eye_vf = (row == col)

    # Pad the visible inputs from V to F lanes once, in VMEM, via a tiny
    # one-shot MXU projector (no F-wide zeros carried through HBM / DMA).
    proj = eye_vf.astype(jnp.float32)                       # (V, F)
    x_pad = jnp.dot(x_ref[...].reshape(Bb * T, V), proj,
                    preferred_element_type=jnp.float32).reshape(Bb, T, F)

    R = jnp.zeros((Bb, V, F), jnp.float32)
    U = jnp.zeros((Bb, V, F), jnp.float32)

    # ---- static unroll over time: keeps R resident in vregs and gives the
    # scheduler the whole recurrence; x_pad[:, t] is a static slice.
    for t in range(T):
        y_t = jnp.broadcast_to(x_pad[:, t, :][:, None, :], (Bb, V, F))
        wr = jnp.dot(R.reshape(Bb * V, F), Wt,
                     preferred_element_type=jnp.float32).reshape(Bb, V, F)
        U = lam_b * (wr + bias_b) + om_lam_b * y_t
        R = phi(U)
    # R from the last step is dead and gets DCE'd; only U's diagonal is kept.

    # out[b, i] = U[b, i, i]
    diag = jnp.sum(jnp.where(eye_vf[None, :, :], U, 0.0), axis=2)   # (Bb, V)
    o_ref[...] = diag[:, None, :].astype(o_ref.dtype)


def general_rnn_forward(X, W, b, Lam, af="tanh", batch_block=1):
    """X: (B, T, V); W: (F, F) torch-Linear weight (out, in); b: (F,);
    Lam: (V, F).  Returns (B, V) = diag(U[:, :, :V]) after the final step."""
    B, T, V = X.shape
    F = W.shape[0]
    assert B % batch_block == 0, "batch_block must divide B"
    n_blocks = B // batch_block

    Xf = jnp.asarray(X, jnp.float32)
    Wt = jnp.asarray(W, jnp.float32).T          # (in, out): kernel does R @ Wt
    b2 = jnp.asarray(b, jnp.float32).reshape(1, F)
    Lamf = jnp.asarray(Lam, jnp.float32)

    kernel = functools.partial(_general_rnn_kernel, af=af, seq_len=T,
                               visible_size=V)

    out3 = pl.pallas_call(
        kernel,
        out_shape=jax.ShapeDtypeStruct((B, 1, V), jnp.float32),
        grid=(n_blocks,),
        in_specs=[
            pl.BlockSpec((batch_block, T, V), lambda i: (i, 0, 0)),
            pl.BlockSpec((F, F), lambda i: (0, 0)),
            pl.BlockSpec((1, F), lambda i: (0, 0)),
            pl.BlockSpec((V, F), lambda i: (0, 0)),
        ],
        out_specs=pl.BlockSpec((batch_block, 1, V), lambda i: (i, 0, 0)),
        compiler_params=pltpu.CompilerParams(
            dimension_semantics=("parallel",)),
    )(Xf, Wt, b2, Lamf)
    return out3[:, 0, :]


def general_rnn_reference(X, W, b, Lam, af="tanh"):
    """Pure-JAX transcription of the PyTorch forward, for verification."""
    B, T, V = X.shape
    F = W.shape[0]
    phi = _phi(af)
    R = jnp.zeros((B, V, F), jnp.float32)
    U = jnp.zeros((B, V, F), jnp.float32)
    for t in range(T):
        Y = jnp.zeros((B, V, F), jnp.float32)
        Y = Y.at[:, :, :V].set(jnp.broadcast_to(X[:, t, None, :], (B, V, V)))
        WR = jnp.einsum("bvf,gf->bvg", R, W) + b[None, None, :]
        U = Lam[None] * WR + (1.0 - Lam[None]) * Y
        R = phi(U)
    return jnp.diagonal(U[:, :, :V], axis1=-2, axis2=-1)


if __name__ == "__main__":
    # Module params (small, consistent with the forward pass).
    visible_size = 8
    hidden_size = 24
    full_size = visible_size + hidden_size   # 32
    recurrence = 0.5
    af = "tanh"
    use_bias = True

    B, T = 2, 8

    key = jax.random.PRNGKey(0)
    k_w, k_b, k_x = jax.random.split(key, 3)

    # Deterministic synthetic parameters (PyTorch-Linear-like uniform init).
    bound = 1.0 / jnp.sqrt(full_size)
    W = jax.random.uniform(k_w, (full_size, full_size), jnp.float32, -bound, bound)
    if use_bias:
        b = jax.random.uniform(k_b, (full_size,), jnp.float32, -bound, bound)
    else:
        b = jnp.zeros((full_size,), jnp.float32)

    # Lambda: (V, F), first V cols = lambda, next H cols = 1, diagonal = 1.
    Lam = jnp.concatenate(
        [jnp.full((visible_size, visible_size), recurrence, jnp.float32),
         jnp.ones((visible_size, hidden_size), jnp.float32)], axis=1)
    idx = jnp.arange(visible_size)
    Lam = Lam.at[idx, idx].set(1.0)

    X = jax.random.normal(k_x, (B, T, visible_size), jnp.float32)

    # batch_block=1 -> grid=(B,) "parallel": both v7x TensorCores get work.
    out = general_rnn_forward(X, W, b, Lam, af=af, batch_block=1)
    out = jax.block_until_ready(out)

    ref = general_rnn_reference(X, W, b, Lam, af=af)
    assert out.shape == (B, visible_size)
    assert jnp.allclose(out, ref, atol=1e-5, rtol=1e-5), (out, ref)

    print("KERNEL_OK")
</pallas_src>

<mosaic_0001>
module attributes {stable_mosaic.version = 11 : i64} {
  func.func @_general_rnn_kernel(%arg0: i32, %arg1: memref<1x8x8xf32, #tpu.memory_space<vmem>>, %arg2: memref<32x32xf32, #tpu.memory_space<vmem>>, %arg3: memref<1x32xf32, #tpu.memory_space<vmem>>, %arg4: memref<8x32xf32, #tpu.memory_space<vmem>>, %arg5: memref<1x1x8xf32, #tpu.memory_space<vmem>>) attributes {dimension_semantics = [#tpu.dimension_semantics<parallel>], iteration_bounds = array<i64: 2>, scalar_prefetch = 0 : i64, scratch_operands = 0 : i64, tpu.core_type = #tpu.core_type<tc>, window_params = [{transform_indices = @transform_0, window_bounds = array<i64: 1, 8, 8>}, {pipeline_mode = #tpu.pipeline_mode<synchronous>, transform_indices = @transform_1, window_bounds = array<i64: 32, 32>}, {pipeline_mode = #tpu.pipeline_mode<synchronous>, transform_indices = @transform_2, window_bounds = array<i64: 1, 32>}, {pipeline_mode = #tpu.pipeline_mode<synchronous>, transform_indices = @transform_3, window_bounds = array<i64: 8, 32>}, {transform_indices = @transform_4, window_bounds = array<i64: 1, 1, 8>}]} {
    %c0 = arith.constant 0 : index
    %c0_0 = arith.constant 0 : index
    %0 = vector.load %arg2[%c0, %c0_0] : memref<32x32xf32, #tpu.memory_space<vmem>>, vector<32x32xf32>
    %c0_1 = arith.constant 0 : index
    %c0_2 = arith.constant 0 : index
    %1 = vector.load %arg4[%c0_1, %c0_2] : memref<8x32xf32, #tpu.memory_space<vmem>>, vector<8x32xf32>
    %2 = vector.shape_cast %1 : vector<8x32xf32> to vector<1x8x32xf32>
    %cst = arith.constant 1.000000e+00 : f32
    %3 = vector.broadcast %cst : f32 to vector<8x32xf32>
    %4 = arith.subf %3, %1 : vector<8x32xf32>
    %5 = vector.shape_cast %4 : vector<8x32xf32> to vector<1x8x32xf32>
    %c0_3 = arith.constant 0 : index
    %c0_4 = arith.constant 0 : index
    %6 = vector.load %arg3[%c0_3, %c0_4] : memref<1x32xf32, #tpu.memory_space<vmem>>, vector<1x32xf32>
    %7 = vector.shape_cast %6 : vector<1x32xf32> to vector<1x1x32xf32>
    %8 = vector.shape_cast %7 : vector<1x1x32xf32> to vector<1x1x32xf32>
    %9 = vector.broadcast %8 : vector<1x1x32xf32> to vector<1x8x32xf32>
    %10 = tpu.iota {dimensions = array<i32: 0>} : vector<8x32xi32>
    %11 = tpu.iota {dimensions = array<i32: 1>} : vector<8x32xi32>
    %12 = arith.cmpi eq, %10, %11 : vector<8x32xi32>
    %13 = arith.extui %12 : vector<8x32xi1> to vector<8x32xi32>
    %14 = arith.sitofp %13 : vector<8x32xi32> to vector<8x32xf32>
    %c0_5 = arith.constant 0 : index
    %c0_6 = arith.constant 0 : index
    %c0_7 = arith.constant 0 : index
    %15 = vector.load %arg1[%c0_5, %c0_6, %c0_7] : memref<1x8x8xf32, #tpu.memory_space<vmem>>, vector<1x8x8xf32>
    %16 = vector.shape_cast %15 : vector<1x8x8xf32> to vector<8x8xf32>
    %cst_8 = arith.constant dense<0.000000e+00> : vector<8x32xf32>
    %17 = tpu.matmul %16, %14, %cst_8 {dimension_numbers = #tpu.dot_dimension_numbers<[1], [0], [0], [1], [0, 0, 1, 1], [], []>} : vector<8x8xf32>, vector<8x32xf32>, vector<8x32xf32> -> vector<8x32xf32>
    %18 = vector.shape_cast %17 : vector<8x32xf32> to vector<1x8x32xf32>
    %cst_9 = arith.constant 0.000000e+00 : f32
    %19 = vector.broadcast %cst_9 : f32 to vector<1x8x32xf32>
    %20 = vector.extract_strided_slice %18 {offsets = [0, 0, 0], sizes = [1, 1, 32], strides = [1, 1, 1]} : vector<1x8x32xf32> to vector<1x1x32xf32>
    %21 = vector.shape_cast %20 : vector<1x1x32xf32> to vector<1x32xf32>
    %22 = vector.shape_cast %21 : vector<1x32xf32> to vector<1x1x32xf32>
    %23 = vector.shape_cast %22 : vector<1x1x32xf32> to vector<1x1x32xf32>
    %24 = vector.broadcast %23 : vector<1x1x32xf32> to vector<1x8x32xf32>
    %25 = vector.shape_cast %19 : vector<1x8x32xf32> to vector<8x32xf32>
    %cst_10 = arith.constant dense<0.000000e+00> : vector<8x32xf32>
    %26 = tpu.matmul %25, %0, %cst_10 {dimension_numbers = #tpu.dot_dimension_numbers<[1], [0], [0], [1], [0, 0, 1, 1], [], []>} : vector<8x32xf32>, vector<32x32xf32>, vector<8x32xf32> -> vector<8x32xf32>
    %27 = vector.shape_cast %26 : vector<8x32xf32> to vector<1x8x32xf32>
    %28 = arith.addf %27, %9 : vector<1x8x32xf32>
    %29 = arith.mulf %2, %28 : vector<1x8x32xf32>
    %30 = arith.mulf %5, %24 : vector<1x8x32xf32>
    %31 = arith.addf %29, %30 : vector<1x8x32xf32>
    %32 = math.tanh %31 : vector<1x8x32xf32>
    %33 = vector.extract_strided_slice %18 {offsets = [0, 1, 0], sizes = [1, 1, 32], strides = [1, 1, 1]} : vector<1x8x32xf32> to vector<1x1x32xf32>
    %34 = vector.shape_cast %33 : vector<1x1x32xf32> to vector<1x32xf32>
    %35 = vector.shape_cast %34 : vector<1x32xf32> to vector<1x1x32xf32>
    %36 = vector.shape_cast %35 : vector<1x1x32xf32> to vector<1x1x32xf32>
    %37 = vector.broadcast %36 : vector<1x1x32xf32> to vector<1x8x32xf32>
    %38 = vector.shape_cast %32 : vector<1x8x32xf32> to vector<8x32xf32>
    %cst_11 = arith.constant dense<0.000000e+00> : vector<8x32xf32>
    %39 = tpu.matmul %38, %0, %cst_11 {dimension_numbers = #tpu.dot_dimension_numbers<[1], [0], [0], [1], [0, 0, 1, 1], [], []>} : vector<8x32xf32>, vector<32x32xf32>, vector<8x32xf32> -> vector<8x32xf32>
    %40 = vector.shape_cast %39 : vector<8x32xf32> to vector<1x8x32xf32>
    %41 = arith.addf %40, %9 : vector<1x8x32xf32>
    %42 = arith.mulf %2, %41 : vector<1x8x32xf32>
    %43 = arith.mulf %5, %37 : vector<1x8x32xf32>
    %44 = arith.addf %42, %43 : vector<1x8x32xf32>
    %45 = math.tanh %44 : vector<1x8x32xf32>
    %46 = vector.extract_strided_slice %18 {offsets = [0, 2, 0], sizes = [1, 1, 32], strides = [1, 1, 1]} : vector<1x8x32xf32> to vector<1x1x32xf32>
    %47 = vector.shape_cast %46 : vector<1x1x32xf32> to vector<1x32xf32>
    %48 = vector.shape_cast %47 : vector<1x32xf32> to vector<1x1x32xf32>
    %49 = vector.shape_cast %48 : vector<1x1x32xf32> to vector<1x1x32xf32>
    %50 = vector.broadcast %49 : vector<1x1x32xf32> to vector<1x8x32xf32>
    %51 = vector.shape_cast %45 : vector<1x8x32xf32> to vector<8x32xf32>
    %cst_12 = arith.constant dense<0.000000e+00> : vector<8x32xf32>
    %52 = tpu.matmul %51, %0, %cst_12 {dimension_numbers = #tpu.dot_dimension_numbers<[1], [0], [0], [1], [0, 0, 1, 1], [], []>} : vector<8x32xf32>, vector<32x32xf32>, vector<8x32xf32> -> vector<8x32xf32>
    %53 = vector.shape_cast %52 : vector<8x32xf32> to vector<1x8x32xf32>
    %54 = arith.addf %53, %9 : vector<1x8x32xf32>
    %55 = arith.mulf %2, %54 : vector<1x8x32xf32>
    %56 = arith.mulf %5, %50 : vector<1x8x32xf32>
    %57 = arith.addf %55, %56 : vector<1x8x32xf32>
    %58 = math.tanh %57 : vector<1x8x32xf32>
    %59 = vector.extract_strided_slice %18 {offsets = [0, 3, 0], sizes = [1, 1, 32], strides = [1, 1, 1]} : vector<1x8x32xf32> to vector<1x1x32xf32>
    %60 = vector.shape_cast %59 : vector<1x1x32xf32> to vector<1x32xf32>
    %61 = vector.shape_cast %60 : vector<1x32xf32> to vector<1x1x32xf32>
    %62 = vector.shape_cast %61 : vector<1x1x32xf32> to vector<1x1x32xf32>
    %63 = vector.broadcast %62 : vector<1x1x32xf32> to vector<1x8x32xf32>
    %64 = vector.shape_cast %58 : vector<1x8x32xf32> to vector<8x32xf32>
    %cst_13 = arith.constant dense<0.000000e+00> : vector<8x32xf32>
    %65 = tpu.matmul %64, %0, %cst_13 {dimension_numbers = #tpu.dot_dimension_numbers<[1], [0], [0], [1], [0, 0, 1, 1], [], []>} : vector<8x32xf32>, vector<32x32xf32>, vector<8x32xf32> -> vector<8x32xf32>
    %66 = vector.shape_cast %65 : vector<8x32xf32> to vector<1x8x32xf32>
    %67 = arith.addf %66, %9 : vector<1x8x32xf32>
    %68 = arith.mulf %2, %67 : vector<1x8x32xf32>
    %69 = arith.mulf %5, %63 : vector<1x8x32xf32>
    %70 = arith.addf %68, %69 : vector<1x8x32xf32>
    %71 = math.tanh %70 : vector<1x8x32xf32>
    %72 = vector.extract_strided_slice %18 {offsets = [0, 4, 0], sizes = [1, 1, 32], strides = [1, 1, 1]} : vector<1x8x32xf32> to vector<1x1x32xf32>
    %73 = vector.shape_cast %72 : vector<1x1x32xf32> to vector<1x32xf32>
    %74 = vector.shape_cast %73 : vector<1x32xf32> to vector<1x1x32xf32>
    %75 = vector.shape_cast %74 : vector<1x1x32xf32> to vector<1x1x32xf32>
    %76 = vector.broadcast %75 : vector<1x1x32xf32> to vector<1x8x32xf32>
    %77 = vector.shape_cast %71 : vector<1x8x32xf32> to vector<8x32xf32>
    %cst_14 = arith.constant dense<0.000000e+00> : vector<8x32xf32>
    %78 = tpu.matmul %77, %0, %cst_14 {dimension_numbers = #tpu.dot_dimension_numbers<[1], [0], [0], [1], [0, 0, 1, 1], [], []>} : vector<8x32xf32>, vector<32x32xf32>, vector<8x32xf32> -> vector<8x32xf32>
    %79 = vector.shape_cast %78 : vector<8x32xf32> to vector<1x8x32xf32>
    %80 = arith.addf %79, %9 : vector<1x8x32xf32>
    %81 = arith.mulf %2, %80 : vector<1x8x32xf32>
    %82 = arith.mulf %5, %76 : vector<1x8x32xf32>
    %83 = arith.addf %81, %82 : vector<1x8x32xf32>
    %84 = math.tanh %83 : vector<1x8x32xf32>
    %85 = vector.extract_strided_slice %18 {offsets = [0, 5, 0], sizes = [1, 1, 32], strides = [1, 1, 1]} : vector<1x8x32xf32> to vector<1x1x32xf32>
    %86 = vector.shape_cast %85 : vector<1x1x32xf32> to vector<1x32xf32>
    %87 = vector.shape_cast %86 : vector<1x32xf32> to vector<1x1x32xf32>
    %88 = vector.shape_cast %87 : vector<1x1x32xf32> to vector<1x1x32xf32>
    %89 = vector.broadcast %88 : vector<1x1x32xf32> to vector<1x8x32xf32>
    %90 = vector.shape_cast %84 : vector<1x8x32xf32> to vector<8x32xf32>
    %cst_15 = arith.constant dense<0.000000e+00> : vector<8x32xf32>
    %91 = tpu.matmul %90, %0, %cst_15 {dimension_numbers = #tpu.dot_dimension_numbers<[1], [0], [0], [1], [0, 0, 1, 1], [], []>} : vector<8x32xf32>, vector<32x32xf32>, vector<8x32xf32> -> vector<8x32xf32>
    %92 = vector.shape_cast %91 : vector<8x32xf32> to vector<1x8x32xf32>
    %93 = arith.addf %92, %9 : vector<1x8x32xf32>
    %94 = arith.mulf %2, %93 : vector<1x8x32xf32>
    %95 = arith.mulf %5, %89 : vector<1x8x32xf32>
    %96 = arith.addf %94, %95 : vector<1x8x32xf32>
    %97 = math.tanh %96 : vector<1x8x32xf32>
    %98 = vector.extract_strided_slice %18 {offsets = [0, 6, 0], sizes = [1, 1, 32], strides = [1, 1, 1]} : vector<1x8x32xf32> to vector<1x1x32xf32>
    %99 = vector.shape_cast %98 : vector<1x1x32xf32> to vector<1x32xf32>
    %100 = vector.shape_cast %99 : vector<1x32xf32> to vector<1x1x32xf32>
    %101 = vector.shape_cast %100 : vector<1x1x32xf32> to vector<1x1x32xf32>
    %102 = vector.broadcast %101 : vector<1x1x32xf32> to vector<1x8x32xf32>
    %103 = vector.shape_cast %97 : vector<1x8x32xf32> to vector<8x32xf32>
    %cst_16 = arith.constant dense<0.000000e+00> : vector<8x32xf32>
    %104 = tpu.matmul %103, %0, %cst_16 {dimension_numbers = #tpu.dot_dimension_numbers<[1], [0], [0], [1], [0, 0, 1, 1], [], []>} : vector<8x32xf32>, vector<32x32xf32>, vector<8x32xf32> -> vector<8x32xf32>
    %105 = vector.shape_cast %104 : vector<8x32xf32> to vector<1x8x32xf32>
    %106 = arith.addf %105, %9 : vector<1x8x32xf32>
    %107 = arith.mulf %2, %106 : vector<1x8x32xf32>
    %108 = arith.mulf %5, %102 : vector<1x8x32xf32>
    %109 = arith.addf %107, %108 : vector<1x8x32xf32>
    %110 = math.tanh %109 : vector<1x8x32xf32>
    %111 = vector.extract_strided_slice %18 {offsets = [0, 7, 0], sizes = [1, 1, 32], strides = [1, 1, 1]} : vector<1x8x32xf32> to vector<1x1x32xf32>
    %112 = vector.shape_cast %111 : vector<1x1x32xf32> to vector<1x32xf32>
    %113 = vector.shape_cast %112 : vector<1x32xf32> to vector<1x1x32xf32>
    %114 = vector.shape_cast %113 : vector<1x1x32xf32> to vector<1x1x32xf32>
    %115 = vector.broadcast %114 : vector<1x1x32xf32> to vector<1x8x32xf32>
    %116 = vector.shape_cast %110 : vector<1x8x32xf32> to vector<8x32xf32>
    %cst_17 = arith.constant dense<0.000000e+00> : vector<8x32xf32>
    %117 = tpu.matmul %116, %0, %cst_17 {dimension_numbers = #tpu.dot_dimension_numbers<[1], [0], [0], [1], [0, 0, 1, 1], [], []>} : vector<8x32xf32>, vector<32x32xf32>, vector<8x32xf32> -> vector<8x32xf32>
    %118 = vector.shape_cast %117 : vector<8x32xf32> to vector<1x8x32xf32>
    %119 = arith.addf %118, %9 : vector<1x8x32xf32>
    %120 = arith.mulf %2, %119 : vector<1x8x32xf32>
    %121 = arith.mulf %5, %115 : vector<1x8x32xf32>
    %122 = arith.addf %120, %121 : vector<1x8x32xf32>
    %123 = vector.shape_cast %12 : vector<8x32xi1> to vector<1x8x32xi1>
    %cst_18 = arith.constant 0.000000e+00 : f32
    %124 = vector.broadcast %cst_18 : f32 to vector<1x8x32xf32>
    %125 = arith.select %123, %122, %124 : vector<1x8x32xi1>, vector<1x8x32xf32>
    %cst_19 = arith.constant dense<0.000000e+00> : vector<1x8xf32>
    %126 = vector.multi_reduction <add>, %125, %cst_19 [2] : vector<1x8x32xf32> to vector<1x8xf32>
    %127 = vector.shape_cast %126 : vector<1x8xf32> to vector<1x1x8xf32>
    %c0_20 = arith.constant 0 : index
    %c0_21 = arith.constant 0 : index
    %c0_22 = arith.constant 0 : index
    %128 = vector.load %arg5[%c0_20, %c0_21, %c0_22] : memref<1x1x8xf32, #tpu.memory_space<vmem>>, vector<1x1x8xf32>
    tpu.vector_store %arg5[%c0_20, %c0_21, %c0_22], %127 {strides = array<i32>} : memref<1x1x8xf32, #tpu.memory_space<vmem>>, vector<1x1x8xf32>,
    return
  }
  func.func @transform_0(%arg0: i32) -> (i32, i32, i32) {
    %c0_i32 = arith.constant 0 : i32
    %c0_i32_0 = arith.constant 0 : i32
    %c0_i32_1 = arith.constant 0 : i32
    return %arg0, %c0_i32, %c0_i32_0 : i32, i32, i32
  }
  func.func @transform_1(%arg0: i32) -> (i32, i32) {
    %c0_i32 = arith.constant 0 : i32
    %c0_i32_0 = arith.constant 0 : i32
    %c0_i32_1 = arith.constant 0 : i32
    return %c0_i32, %c0_i32_0 : i32, i32
  }
  func.func @transform_2(%arg0: i32) -> (i32, i32) {
    %c0_i32 = arith.constant 0 : i32
    %c0_i32_0 = arith.constant 0 : i32
    %c0_i32_1 = arith.constant 0 : i32
    return %c0_i32, %c0_i32_0 : i32, i32
  }
  func.func @transform_3(%arg0: i32) -> (i32, i32) {
    %c0_i32 = arith.constant 0 : i32
    %c0_i32_0 = arith.constant 0 : i32
    %c0_i32_1 = arith.constant 0 : i32
    return %c0_i32, %c0_i32_0 : i32, i32
  }
  func.func @transform_4(%arg0: i32) -> (i32, i32, i32) {
    %c0_i32 = arith.constant 0 : i32
    %c0_i32_0 = arith.constant 0 : i32
    %c0_i32_1 = arith.constant 0 : i32
    return %arg0, %c0_i32, %c0_i32_0 : i32, i32, i32
  }
}

</mosaic_0001>

<llo_original>
// kernel: tpu_custom_call.1
$region0: #{tpu_custom_call.1}
  #allocation0 [shape = 'u32[]', space=smem, size = 0x4, offset = 0x4, fixed_abs, tag = 'smem constant byte address 0x4 - core index']
  #allocation1 [shape = 'u32[72,128]{1,0:T(1,128)}', space=vmem, size = 0x9000, scoped, tag = 'internal scratch']
  %s0 = inlined_call_operand.hbm [shape: f32[2,8,8], index: 0, kind: input, shape index: {}]
  %s1 = inlined_call_operand.hbm [shape: f32[32,32], index: 1, kind: input, shape index: {}]
  %s2 = inlined_call_operand.vmem [shape: f32[1,32], index: 2, kind: input, shape index: {}]
  %s3 = inlined_call_operand.hbm [shape: f32[8,32], index: 3, kind: input, shape index: {}]
  %s4 = inlined_call_operand.hbm [shape: f32[2,1,8], index: 4, kind: output, shape index: {}]
  %s5 = sld [smem:[#allocation0]]
  $region61: #{tpu_custom_call.1} parent=0
    _
  %s7 = ssub.s32 1, %s5
  %s8 = scalar_select 0, %s7, %s5
  $region1: #{tpu_custom_call.1} parent=0
    #allocation2 [shape = 'u8[8192]{0}', space=vmem, size = 0x2000, scoped, tag = 'input window, operand 0']
    #allocation3 [shape = 's32[2]{0}', space=sflag, size = 0x8, scoped, tag = 'scoped memory for tpu_custom_call.1']
    #allocation4 [shape = 's32[2]{0}', space=sflag, size = 0x8, scoped, tag = 'scoped memory for tpu_custom_call.1']
    #allocation5 [shape = 'u8[16384]{0}', space=vmem, size = 0x4000, scoped, tag = 'input window, operand 1, single buffered']
    #allocation6 [shape = 's32[1]{0}', space=sflag, size = 0x4, scoped, tag = 'scoped memory for tpu_custom_call.1']
    #allocation7 [shape = 'u8[4096]{0}', space=vmem, size = 0x1000, scoped, tag = 'input window, operand 3, single buffered']
    #allocation8 [shape = 'u8[1024]{0}', space=vmem, size = 0x400, scoped, tag = 'output window, operand 0']
    %9 = vsyncpa [#allocation3], 0
    %s10 = scalar_lea.sflag [#allocation3], 1
    %11 = vsyncpa %s10, 0
    %12 = vsyncpa [#allocation6], 0
    %13 = vsyncpa [#allocation4], 0
    %s14 = scalar_lea.sflag [#allocation4], 1
    %15 = vsyncpa %s14, 0
    loop: start=0, step=1, limit=4
    $region2: #{tpu_custom_call.1} parent=1 // loop_pre_header
      _
    $region3: #{tpu_custom_call.1} parent=1 // loop_header
      %s17 = sphi 0, %s21
      %p18 = scmp.ge.s32.totalorder %s17, 4
      %s27 = sphi 0, %s29
      %s30 = sphi 0, %s27
      %s31 = sphi 0, %s30
      %s47 = sphi 0, %s31
      %s51 = sphi 0, %s51
      %s53 = sphi 0, %s51
      %s54 = sphi 0, %s53
      %s68 = sphi 0, %s54
      %s72 = sphi 0, %s72
      %s74 = sphi 0, %s72
      %s75 = sphi 0, %s74
      %s89 = sphi 0, %s75
      %s93 = sphi 0, %s93
      %s95 = sphi 0, %s93
      %s96 = sphi 0, %s95
      %s110 = sphi 0, %s96
      %s116 = sphi 0, %s118
      %s119 = sphi 0, %s116
      %s120 = sphi 0, %s119
      %s136 = sphi 0, %s120
    $region4: #{tpu_custom_call.1} parent=1 // loop_header_branch
      %20 = sbr.rel (%p18) target = $region8
    $region5: #{tpu_custom_call.1} parent=1 // loop_body
      %s22 = ssub.s32 %s17, 1
      %s23 = ssub.s32 %s17, 2
      %s24 = sadd.s32 %s17, 1
      %s25 = ssub.s32 %s17, %s24
      %p26 = scmp.eq.s32.totalorder %s25, 0
      %s28 = sadd.s32 %s27, 1
      %s29 = scalar_select %p26, %s27, %s28
      %p32 = pneg %p26
      %p33 = scmp.eq.s32.totalorder %s17, 1
      %p34 = por %p32, %p33
      %p35 = scmp.ne.s32.totalorder %s27, %s30
      %p36 = scmp.eq.s32.totalorder %s17, 0
      %p37 = por %p35, %p36
      %p38 = scmp.ne.s32.totalorder %s27, %s30
      %p39 = scmp.eq.s32.totalorder %s22, 1
      %p40 = por %p38, %p39
      %p41 = scmp.ne.s32.totalorder %s30, %s31
      %p42 = scmp.eq.s32.totalorder %s22, 0
      %p43 = por %p41, %p42
      %p44 = scmp.ne.s32.totalorder %s30, %s31
      %p45 = scmp.eq.s32.totalorder %s23, 1
      %p46 = por %p44, %p45
      %p48 = scmp.ne.s32.totalorder %s31, %s47
      %p49 = scmp.eq.s32.totalorder %s23, 0
      %p50 = por %p48, %p49
      %s52 = sadd.s32 %s51, 1
      %p55 = scmp.eq.s32.totalorder %s17, 1
      %p56 = scmp.ne.s32.totalorder %s51, %s53
      %p57 = scmp.eq.s32.totalorder %s17, 0
      %p58 = por %p56, %p57
      %p59 = scmp.ne.s32.totalorder %s51, %s53
      %p60 = scmp.eq.s32.totalorder %s22, 1
      %p61 = por %p59, %p60
      %p62 = scmp.ne.s32.totalorder %s53, %s54
      %p63 = scmp.eq.s32.totalorder %s22, 0
      %p64 = por %p62, %p63
      %p65 = scmp.ne.s32.totalorder %s53, %s54
      %p66 = scmp.eq.s32.totalorder %s23, 1
      %p67 = por %p65, %p66
      %p69 = scmp.ne.s32.totalorder %s54, %s68
      %p70 = scmp.eq.s32.totalorder %s23, 0
      %p71 = por %p69, %p70
      %s73 = sadd.s32 %s72, 1
      %p76 = scmp.eq.s32.totalorder %s17, 1
      %p77 = scmp.ne.s32.totalorder %s72, %s74
      %p78 = scmp.eq.s32.totalorder %s17, 0
      %p79 = por %p77, %p78
      %p80 = scmp.ne.s32.totalorder %s72, %s74
      %p81 = scmp.eq.s32.totalorder %s22, 1
      %p82 = por %p80, %p81
      %p83 = scmp.ne.s32.totalorder %s74, %s75
      %p84 = scmp.eq.s32.totalorder %s22, 0
      %p85 = por %p83, %p84
      %p86 = scmp.ne.s32.totalorder %s74, %s75
      %p87 = scmp.eq.s32.totalorder %s23, 1
      %p88 = por %p86, %p87
      %p90 = scmp.ne.s32.totalorder %s75, %s89
      %p91 = scmp.eq.s32.totalorder %s23, 0
      %p92 = por %p90, %p91
      %s94 = sadd.s32 %s93, 1
      %p97 = scmp.eq.s32.totalorder %s17, 1
      %p98 = scmp.ne.s32.totalorder %s93, %s95
      %p99 = scmp.eq.s32.totalorder %s17, 0
      %p100 = por %p98, %p99
      %p101 = scmp.ne.s32.totalorder %s93, %s95
      %p102 = scmp.eq.s32.totalorder %s22, 1
      %p103 = por %p101, %p102
      %p104 = scmp.ne.s32.totalorder %s95, %s96
      %p105 = scmp.eq.s32.totalorder %s22, 0
      %p106 = por %p104, %p105
      %p107 = scmp.ne.s32.totalorder %s95, %s96
      %p108 = scmp.eq.s32.totalorder %s23, 1
      %p109 = por %p107, %p108
      %p111 = scmp.ne.s32.totalorder %s96, %s110
      %p112 = scmp.eq.s32.totalorder %s23, 0
      %p113 = por %p111, %p112
      %s114 = ssub.s32 %s17, %s24
      %p115 = scmp.eq.s32.totalorder %s114, 0
      %s117 = sadd.s32 %s116, 1
      %s118 = scalar_select %p115, %s116, %s117
      %p121 = pneg %p115
      %p122 = scmp.eq.s32.totalorder %s17, 1
      %p123 = por %p121, %p122
      %p124 = scmp.ne.s32.totalorder %s116, %s119
      %p125 = scmp.eq.s32.totalorder %s17, 0
      %p126 = por %p124, %p125
      %p127 = scmp.ne.s32.totalorder %s116, %s119
      %p128 = scmp.eq.s32.totalorder %s22, 1
      %p129 = por %p127, %p128
      %p130 = scmp.ne.s32.totalorder %s119, %s120
      %p131 = scmp.eq.s32.totalorder %s22, 0
      %p132 = por %p130, %p131
      %p133 = scmp.ne.s32.totalorder %s119, %s120
      %p134 = scmp.eq.s32.totalorder %s23, 1
      %p135 = por %p133, %p134
      %p137 = scmp.ne.s32.totalorder %s120, %s136
      %p138 = scmp.eq.s32.totalorder %s23, 0
      %p139 = por %p137, %p138
      %p140 = scmp.le.s32.totalorder 1, %s17
      %p141 = scmp.lt.s32.totalorder %s17, 3
      %p142 = pnand %p140, %p141
      %p143 = pneg %p142
      // Predicated region
      $region9: #{tpu_custom_call.1} parent=5 // pred_check
        _
      $region10: #{tpu_custom_call.1} parent=5 // pred_check_branch
        %145 = sbr.rel (%p142) target = $region12
      $region11: #{tpu_custom_call.1} parent=5 // pred_region
        %s146 = ssub.s32 %s17, 1
        // Predicated region
        $region13: #{tpu_custom_call.1} parent=11 // pred_check
          %p147 = pneg %p64
        $region14: #{tpu_custom_call.1} parent=11 // pred_check_branch
          %149 = sbr.rel (%p147) target = $region16
        $region15: #{tpu_custom_call.1} parent=11 // pred_region
          %151 = vsyncadd [#allocation6], 0
          %s152 = sshll.u32 %s1, 4
          %s153 = int_to_ptr.hbm [resolvable:$true] %s152
          %s154 = sshll.u32 [#allocation5], 4
          %s155 = int_to_ptr.vmem [resolvable:$true] %s154
          %160 = dma.hbm_to_vmem [thread:$0]  %s153, 512, %s155, [#allocation6], 128, 128, 8
        $region16: #{tpu_custom_call.1} parent=11 // pred_fallthru
          _
        // Predicated region
        $region17: #{tpu_custom_call.1} parent=11 // pred_check
          %p161 = pneg %p85
        $region18: #{tpu_custom_call.1} parent=11 // pred_check_branch
          %163 = sbr.rel (%p161) target = $region20
        $region19: #{tpu_custom_call.1} parent=11 // pred_region
          _
        $region20: #{tpu_custom_call.1} parent=11 // pred_fallthru
          _
        // Predicated region
        $region21: #{tpu_custom_call.1} parent=11 // pred_check
          %p164 = pneg %p106
        $region22: #{tpu_custom_call.1} parent=11 // pred_check_branch
          %166 = sbr.rel (%p164) target = $region24
        $region23: #{tpu_custom_call.1} parent=11 // pred_region
          %168 = vsyncadd [#allocation6], 0
          %s170 = sshll.u32 %s3, 4
          %s171 = int_to_ptr.hbm [resolvable:$true] %s170
          %s172 = sshll.u32 [#allocation7], 4
          %s173 = int_to_ptr.vmem [resolvable:$true] %s172
          %175 = dma.hbm_to_vmem [thread:$0]  %s171, 128, %s173, [#allocation6]
        $region24: #{tpu_custom_call.1} parent=11 // pred_fallthru
          _
      $region12: #{tpu_custom_call.1} parent=5 // pred_fallthru
        _
      %p176 = scmp.lt.s32.totalorder %s17, 2
      // Predicated region
      $region25: #{tpu_custom_call.1} parent=5 // pred_check
        %p177 = pneg %p176
      $region26: #{tpu_custom_call.1} parent=5 // pred_check_branch
        %179 = sbr.rel (%p177) target = $region28
      $region27: #{tpu_custom_call.1} parent=5 // pred_region
        // Predicated region
        $region29: #{tpu_custom_call.1} parent=27 // pred_check
          %p180 = pneg %p37
        $region30: #{tpu_custom_call.1} parent=27 // pred_check_branch
          %182 = sbr.rel (%p180) target = $region32
        $region31: #{tpu_custom_call.1} parent=27 // pred_region
          %s183 = sand.u32 %s27, 1
          %s184 = scalar_lea.sflag [#allocation3], %s183
          %s185 = sand.u32 %s27, 1
          %s186 = smul.addr %s185, 8
          %s187 = scalar_lea.vmem [#allocation2], %s186
          %189 = vsyncadd %s184, 0
          %s190 = smul.addr %s17, 8
          %s191 = scalar_lea.hbm %s0, %s190
          %s193 = sshll.u32 %s191, 4
          %s194 = int_to_ptr.hbm [resolvable:$true] %s193
          %s195 = sshll.u32 %s187, 4
          %s196 = int_to_ptr.vmem [resolvable:$true] %s195
          %198 = dma.hbm_to_vmem [thread:$0]  %s194, 128, %s196, %s184
        $region32: #{tpu_custom_call.1} parent=27 // pred_fallthru
          _
      $region28: #{tpu_custom_call.1} parent=5 // pred_fallthru
        _
      %p199 = scmp.le.s32.totalorder 1, %s17
      %p200 = scmp.lt.s32.totalorder %s17, 3
      %p201 = pnand %p199, %p200
      %p202 = pneg %p201
      // Predicated region
      $region33: #{tpu_custom_call.1} parent=5 // pred_check
        _
      $region34: #{tpu_custom_call.1} parent=5 // pred_check_branch
        %204 = sbr.rel (%p201) target = $region36
      $region35: #{tpu_custom_call.1} parent=5 // pred_region
        %s205 = ssub.s32 %s17, 1
        %s206 = sand.u32 %s30, 1
        %s207 = scalar_lea.sflag [#allocation3], %s206
        %s208 = sand.u32 %s30, 1
        %s209 = smul.addr %s208, 8
        %s210 = scalar_lea.vmem [#allocation2], %s209
        // Predicated region
        $region37: #{tpu_custom_call.1} parent=35 // pred_check
          %p211 = pneg %p43
        $region38: #{tpu_custom_call.1} parent=35 // pred_check_branch
          %213 = sbr.rel (%p211) target = $region40
        $region39: #{tpu_custom_call.1} parent=35 // pred_region
          %215 = dma.done %s207, 128
        $region40: #{tpu_custom_call.1} parent=35 // pred_fallthru
          _
        // Predicated region
        $region41: #{tpu_custom_call.1} parent=35 // pred_check
          %p216 = pneg %p64
        $region42: #{tpu_custom_call.1} parent=35 // pred_check_branch
          %218 = sbr.rel (%p216) target = $region44
        $region43: #{tpu_custom_call.1} parent=35 // pred_region
          %220 = dma.done [#allocation6], 512
        $region44: #{tpu_custom_call.1} parent=35 // pred_fallthru
          _
        // Predicated region
        $region45: #{tpu_custom_call.1} parent=35 // pred_check
          %p221 = pneg %p106
        $region46: #{tpu_custom_call.1} parent=35 // pred_check_branch
          %223 = sbr.rel (%p221) target = $region48
        $region47: #{tpu_custom_call.1} parent=35 // pred_region
          %225 = dma.done [#allocation6], 128
        $region48: #{tpu_custom_call.1} parent=35 // pred_fallthru
          _
        %s226 = sand.u32 %s30, 1
        %s227 = scalar_lea.sflag [#allocation3], %s226
        %s228 = sand.u32 %s30, 1
        %s229 = smul.addr %s228, 8
        %s230 = scalar_lea.vmem [#allocation2], %s229
        %p231 = pneg %p43
        %p232 = pneg %p40
        %p233 = pneg %p64
        %p234 = pneg %p61
        %p235 = pneg %p85
        %p236 = pneg %p82
        %p237 = pneg %p106
        %p238 = pneg %p103
        %p239 = pneg %p132
        %p240 = pneg %p129
        %s241 = sand.u32 %s119, 1
        %s242 = scalar_lea.sflag [#allocation4], %s241
        %s243 = sand.u32 %s119, 1
        %s244 = scalar_lea.vmem [#allocation8], %s243
        %v245 = vld [vmem:[#allocation5] sm:$0xff]
        %v246 = vld [vmem:[#allocation5 + $0x8] sm:$0xff]
        %v247 = vld [vmem:[#allocation5 + $0x10] sm:$0xff]
        %v248 = vld [vmem:[#allocation5 + $0x18] sm:$0xff]
        %v249 = vld [vmem:[#allocation7] sm:$0xff]
        %v250 = vsub.f32 1.0, %v249
        %v251 = vld [vmem:[%s2] sm:$0x1]
        %v253 = vperm.slane %v251, 0
        %v255 = vlaneseq
        %v256 = vshrl.u32 %v255, 7
        %v257 = vlaneseq
        %v258 = vand.u32 %v257, 127
        %vm259 = vcmp.eq.s32.totalorder %v256, %v258
        %v260 = vsel %vm259, 1, 0
        %v261 = vcvt.s32.f32 %v260
        %v262 = vld [vmem:[%s210] sm:$0xff]
        %vm263 = vcmask 64512
        %v265 = vsel %vm263, %v262, 0
        %267 = vmatpush.msra.mxu0 0.0
        %268 = vmatpush.msra.mxu0 0.0
        %269 = vmatpush.msra.mxu0 0.0
        %270 = vmatpush.msra.mxu0 0.0
        %271 = vmatpush.msra.mxu0 0.0
        %272 = vmatpush.msra.mxu0 0.0
        %273 = vmatpush.msra.mxu0 0.0
        %274 = vmatpush.msra.mxu0 0.0
        %275 = vmatpush.msra.mxu0 0.0
        %276 = vmatpush.msra.mxu0 0.0
        %277 = vmatpush.msra.mxu0 0.0
        %278 = vmatpush.msra.mxu0 0.0
        %279 = vmatpush.msra.mxu0 0.0
        %280 = vmatpush.msra.mxu0 0.0
        %281 = vmatpush.msra.mxu0 0.0
        %282 = vmatpush.msra.mxu0 %v261
        %283 = vmatmul.f32.gmra.mxu0 %v265
        %v284 = vpop.f32.mrf.mxu0
        %v285 = vadd.f32 0.0, %v284
        %286 = vdwg.mxu0
        %v287 = vperm.slane %v285, 0
        %vm288 = vcmask 261120
        %v290 = vsel %vm288, 0.0, 0
        %292 = vmatpush.msra.mxu0 0.0
        %293 = vmatpush.msra.mxu0 0.0
        %294 = vmatpush.msra.mxu0 0.0
        %295 = vmatpush.msra.mxu0 0.0
        %296 = vmatpush.msra.mxu0 0.0
        %297 = vmatpush.msra.mxu0 0.0
        %298 = vmatpush.msra.mxu0 0.0
        %299 = vmatpush.msra.mxu0 0.0
        %300 = vmatpush.msra.mxu0 0.0
        %301 = vmatpush.msra.mxu0 0.0
        %302 = vmatpush.msra.mxu0 0.0
        %303 = vmatpush.msra.mxu0 0.0
        %304 = vmatpush.msra.mxu0 %v248
        %305 = vmatpush.msra.mxu0 %v247
        %306 = vmatpush.msra.mxu0 %v246
        %307 = vmatpush.msra.mxu0 %v245
        %308 = vmatmul.f32.gmra.mxu0 %v290
        %v309 = vpop.f32.mrf.mxu0
        %v310 = vadd.f32 0.0, %v309
        %311 = vdwg.mxu0
        %v312 = vadd.f32 %v310, %v253
        %v313 = vmul.f32 %v249, %v312
        %v314 = vmul.f32 %v250, %v287
        %v315 = vadd.f32 %v313, %v314
        %v316 = vtanh.pop %v315
        %v317 = vperm.slane %v285, 1
        %v319 = vsel %vm288, %v316, 0
        %321 = vmatpush.msra.mxu0 0.0
        %322 = vmatpush.msra.mxu0 0.0
        %323 = vmatpush.msra.mxu0 0.0
        %324 = vmatpush.msra.mxu0 0.0
        %325 = vmatpush.msra.mxu0 0.0
        %326 = vmatpush.msra.mxu0 0.0
        %327 = vmatpush.msra.mxu0 0.0
        %328 = vmatpush.msra.mxu0 0.0
        %329 = vmatpush.msra.mxu0 0.0
        %330 = vmatpush.msra.mxu0 0.0
        %331 = vmatpush.msra.mxu0 0.0
        %332 = vmatpush.msra.mxu0 0.0
        %333 = vmatpush.msra.mxu0 %v248
        %334 = vmatpush.msra.mxu0 %v247
        %335 = vmatpush.msra.mxu0 %v246
        %336 = vmatpush.msra.mxu0 %v245
        %337 = vmatmul.f32.gmra.mxu0 %v319
        %v338 = vpop.f32.mrf.mxu0
        %v339 = vadd.f32 0.0, %v338
        %340 = vdwg.mxu0
        %v341 = vadd.f32 %v339, %v253
        %v342 = vmul.f32 %v249, %v341
        %v343 = vmul.f32 %v250, %v317
        %v344 = vadd.f32 %v342, %v343
        %v345 = vtanh.pop %v344
        %v346 = vperm.slane %v285, 2
        %v348 = vsel %vm288, %v345, 0
        %350 = vmatpush.msra.mxu0 0.0
        %351 = vmatpush.msra.mxu0 0.0
        %352 = vmatpush.msra.mxu0 0.0
        %353 = vmatpush.msra.mxu0 0.0
        %354 = vmatpush.msra.mxu0 0.0
        %355 = vmatpush.msra.mxu0 0.0
        %356 = vmatpush.msra.mxu0 0.0
        %357 = vmatpush.msra.mxu0 0.0
        %358 = vmatpush.msra.mxu0 0.0
        %359 = vmatpush.msra.mxu0 0.0
        %360 = vmatpush.msra.mxu0 0.0
        %361 = vmatpush.msra.mxu0 0.0
        %362 = vmatpush.msra.mxu0 %v248
        %363 = vmatpush.msra.mxu0 %v247
        %364 = vmatpush.msra.mxu0 %v246
        %365 = vmatpush.msra.mxu0 %v245
        %366 = vmatmul.f32.gmra.mxu0 %v348
        %v367 = vpop.f32.mrf.mxu0
        %v368 = vadd.f32 0.0, %v367
        %369 = vdwg.mxu0
        %v370 = vadd.f32 %v368, %v253
        %v371 = vmul.f32 %v249, %v370
        %v372 = vmul.f32 %v250, %v346
        %v373 = vadd.f32 %v371, %v372
        %v374 = vtanh.pop %v373
        %v375 = vperm.slane %v285, 3
        %v377 = vsel %vm288, %v374, 0
        %379 = vmatpush.msra.mxu0 0.0
        %380 = vmatpush.msra.mxu0 0.0
        %381 = vmatpush.msra.mxu0 0.0
        %382 = vmatpush.msra.mxu0 0.0
        %383 = vmatpush.msra.mxu0 0.0
        %384 = vmatpush.msra.mxu0 0.0
        %385 = vmatpush.msra.mxu0 0.0
        %386 = vmatpush.msra.mxu0 0.0
        %387 = vmatpush.msra.mxu0 0.0
        %388 = vmatpush.msra.mxu0 0.0
        %389 = vmatpush.msra.mxu0 0.0
        %390 = vmatpush.msra.mxu0 0.0
        %391 = vmatpush.msra.mxu0 %v248
        %392 = vmatpush.msra.mxu0 %v247
        %393 = vmatpush.msra.mxu0 %v246
        %394 = vmatpush.msra.mxu0 %v245
        %395 = vmatmul.f32.gmra.mxu0 %v377
        %v396 = vpop.f32.mrf.mxu0
        %v397 = vadd.f32 0.0, %v396
        %398 = vdwg.mxu0
        %v399 = vadd.f32 %v397, %v253
        %v400 = vmul.f32 %v249, %v399
        %v401 = vmul.f32 %v250, %v375
        %v402 = vadd.f32 %v400, %v401
        %v403 = vtanh.pop %v402
        %v404 = vperm.slane %v285, 4
        %v406 = vsel %vm288, %v403, 0
        %408 = vmatpush.msra.mxu0 0.0
        %409 = vmatpush.msra.mxu0 0.0
        %410 = vmatpush.msra.mxu0 0.0
        %411 = vmatpush.msra.mxu0 0.0
        %412 = vmatpush.msra.mxu0 0.0
        %413 = vmatpush.msra.mxu0 0.0
        %414 = vmatpush.msra.mxu0 0.0
        %415 = vmatpush.msra.mxu0 0.0
        %416 = vmatpush.msra.mxu0 0.0
        %417 = vmatpush.msra.mxu0 0.0
        %418 = vmatpush.msra.mxu0 0.0
        %419 = vmatpush.msra.mxu0 0.0
        %420 = vmatpush.msra.mxu0 %v248
        %421 = vmatpush.msra.mxu0 %v247
        %422 = vmatpush.msra.mxu0 %v246
        %423 = vmatpush.msra.mxu0 %v245
        %424 = vmatmul.f32.gmra.mxu0 %v406
        %v425 = vpop.f32.mrf.mxu0
        %v426 = vadd.f32 0.0, %v425
        %427 = vdwg.mxu0
        %v428 = vadd.f32 %v426, %v253
        %v429 = vmul.f32 %v249, %v428
        %v430 = vmul.f32 %v250, %v404
        %v431 = vadd.f32 %v429, %v430
        %v432 = vtanh.pop %v431
        %v433 = vperm.slane %v285, 5
        %v435 = vsel %vm288, %v432, 0
        %437 = vmatpush.msra.mxu0 0.0
        %438 = vmatpush.msra.mxu0 0.0
        %439 = vmatpush.msra.mxu0 0.0
        %440 = vmatpush.msra.mxu0 0.0
        %441 = vmatpush.msra.mxu0 0.0
        %442 = vmatpush.msra.mxu0 0.0
        %443 = vmatpush.msra.mxu0 0.0
        %444 = vmatpush.msra.mxu0 0.0
        %445 = vmatpush.msra.mxu0 0.0
        %446 = vmatpush.msra.mxu0 0.0
        %447 = vmatpush.msra.mxu0 0.0
        %448 = vmatpush.msra.mxu0 0.0
        %449 = vmatpush.msra.mxu0 %v248
        %450 = vmatpush.msra.mxu0 %v247
        %451 = vmatpush.msra.mxu0 %v246
        %452 = vmatpush.msra.mxu0 %v245
        %453 = vmatmul.f32.gmra.mxu0 %v435
        %v454 = vpop.f32.mrf.mxu0
        %v455 = vadd.f32 0.0, %v454
        %456 = vdwg.mxu0
        %v457 = vadd.f32 %v455, %v253
        %v458 = vmul.f32 %v249, %v457
        %v459 = vmul.f32 %v250, %v433
        %v460 = vadd.f32 %v458, %v459
        %v461 = vtanh.pop %v460
        %v462 = vperm.slane %v285, 6
        %v464 = vsel %vm288, %v461, 0
        %466 = vmatpush.msra.mxu0 0.0
        %467 = vmatpush.msra.mxu0 0.0
        %468 = vmatpush.msra.mxu0 0.0
        %469 = vmatpush.msra.mxu0 0.0
        %470 = vmatpush.msra.mxu0 0.0
        %471 = vmatpush.msra.mxu0 0.0
        %472 = vmatpush.msra.mxu0 0.0
        %473 = vmatpush.msra.mxu0 0.0
        %474 = vmatpush.msra.mxu0 0.0
        %475 = vmatpush.msra.mxu0 0.0
        %476 = vmatpush.msra.mxu0 0.0
        %477 = vmatpush.msra.mxu0 0.0
        %478 = vmatpush.msra.mxu0 %v248
        %479 = vmatpush.msra.mxu0 %v247
        %480 = vmatpush.msra.mxu0 %v246
        %481 = vmatpush.msra.mxu0 %v245
        %482 = vmatmul.f32.gmra.mxu0 %v464
        %v483 = vpop.f32.mrf.mxu0
        %v484 = vadd.f32 0.0, %v483
        %485 = vdwg.mxu0
        %v486 = vadd.f32 %v484, %v253
        %v487 = vmul.f32 %v249, %v486
        %v488 = vmul.f32 %v250, %v462
        %v489 = vadd.f32 %v487, %v488
        %v490 = vtanh.pop %v489
        %v491 = vperm.slane %v285, 7
        %v493 = vsel %vm288, %v490, 0
        %495 = vmatpush.msra.mxu0 0.0
        %496 = vmatpush.msra.mxu0 0.0
        %497 = vmatpush.msra.mxu0 0.0
        %498 = vmatpush.msra.mxu0 0.0
        %499 = vmatpush.msra.mxu0 0.0
        %500 = vmatpush.msra.mxu0 0.0
        %501 = vmatpush.msra.mxu0 0.0
        %502 = vmatpush.msra.mxu0 0.0
        %503 = vmatpush.msra.mxu0 0.0
        %504 = vmatpush.msra.mxu0 0.0
        %505 = vmatpush.msra.mxu0 0.0
        %506 = vmatpush.msra.mxu0 0.0
        %507 = vmatpush.msra.mxu0 %v248
        %508 = vmatpush.msra.mxu0 %v247
        %509 = vmatpush.msra.mxu0 %v246
        %510 = vmatpush.msra.mxu0 %v245
        %511 = vmatmul.f32.gmra.mxu0 %v493
        %v512 = vpop.f32.mrf.mxu0
        %v513 = vadd.f32 0.0, %v512
        %514 = vdwg.mxu0
        %v515 = vadd.f32 %v513, %v253
        %v516 = vmul.f32 %v249, %v515
        %v517 = vmul.f32 %v250, %v491
        %v518 = vadd.f32 %v516, %v517
        %v519 = vsel %vm259, %v518, 0.0
        %v520 = vsel %vm288, %v519, 0.0
        %521 = vadd.xlane.f32.xlu0 %v520
        %v522 = vpop.xlane.xlu0 %521
        %v524 = vperm.slane %v522, %v258
        %vm526 = vcmask 57344
        %527 = vst.msk [vmem:[%s244] sm:$0x1] %vm526, %v524
        %s528 = sand.u32 %s119, 1
        %s529 = scalar_lea.sflag [#allocation4], %s528
        %s530 = sand.u32 %s119, 1
        %s531 = scalar_lea.vmem [#allocation8], %s530
        // Predicated region
        $region49: #{tpu_custom_call.1} parent=35 // pred_check
          %p532 = pneg %p129
        $region50: #{tpu_custom_call.1} parent=35 // pred_check_branch
          %534 = sbr.rel (%p532) target = $region52
        $region51: #{tpu_custom_call.1} parent=35 // pred_region
          %536 = vsyncadd %s529, 0
          %s537 = scalar_lea.hbm %s4, %s22
          %s539 = sshll.u32 %s531, 4
          %s540 = int_to_ptr.vmem [resolvable:$true] %s539
          %s541 = sshll.u32 %s537, 4
          %s542 = int_to_ptr.hbm [resolvable:$true] %s541
          %544 = dma.vmem_to_hbm [thread:$0]  %s540, 16, %s542, %s529
        $region52: #{tpu_custom_call.1} parent=35 // pred_fallthru
          _
      $region36: #{tpu_custom_call.1} parent=5 // pred_fallthru
        _
      %p545 = scmp.le.s32.totalorder 2, %s17
      // Predicated region
      $region53: #{tpu_custom_call.1} parent=5 // pred_check
        %p546 = pneg %p545
      $region54: #{tpu_custom_call.1} parent=5 // pred_check_branch
        %548 = sbr.rel (%p546) target = $region56
      $region55: #{tpu_custom_call.1} parent=5 // pred_region
        %s549 = ssub.s32 %s17, 2
        // Predicated region
        $region57: #{tpu_custom_call.1} parent=55 // pred_check
          %p550 = pneg %p135
        $region58: #{tpu_custom_call.1} parent=55 // pred_check_branch
          %552 = sbr.rel (%p550) target = $region60
        $region59: #{tpu_custom_call.1} parent=55 // pred_region
          %s553 = sand.u32 %s120, 1
          %s554 = scalar_lea.sflag [#allocation4], %s553
          %s555 = sand.u32 %s120, 1
          %s556 = scalar_lea.vmem [#allocation8], %s555
          %558 = dma.done %s554, 16
        $region60: #{tpu_custom_call.1} parent=55 // pred_fallthru
          _
      $region56: #{tpu_custom_call.1} parent=5 // pred_fallthru
        _
    $region6: #{tpu_custom_call.1} parent=1 // loop_footer
      %s21 = sadd.s32 1, %s17
    $region7: #{tpu_custom_call.1} parent=1 // loop_footer_branch
      %16 = sbr.rel target = $region3
    $region8: #{tpu_custom_call.1} parent=1 // loop_exit
      _
    %559 = vsyncpa [#allocation3], 1
    %s560 = scalar_lea.sflag [#allocation3], 1
    %561 = vsyncpa %s560, 1
    %562 = vsyncpa [#allocation6], 1
    %563 = vsyncpa [#allocation4], 1
    %s564 = scalar_lea.sflag [#allocation4], 1
    %565 = vsyncpa %s564, 1

</llo_original>
